<compile_context>
chip_gen: v7x
topology: tpu7x:2x2x1
jax: 0.10.0
libtpu: 0.0.40
codegen_flags: <defaults>
</compile_context>

<pallas_src>
import math
import numpy as np
import jax
import jax.numpy as jnp
from jax import lax
from jax.experimental import pallas as pl
from jax.experimental.pallas import tpu as pltpu

LN_EPS = 1e-5
INV_SQRT2 = 1.0 / math.sqrt(2.0)


def _make_kernel(T, Bc, D, H, two_d):
    def kernel(x_ref, gamma_ref, beta_ref, wih_ref, whh_ref, bx_ref, bhn_ref,
               out_ref, gx_scr):
        # ---- LayerNorm over rnn_dim ----
        x = x_ref[...].astype(jnp.float32)                     # (T, Bc, D)
        mean = jnp.mean(x, axis=-1, keepdims=True)
        var = jnp.mean((x - mean) ** 2, axis=-1, keepdims=True)
        xn = (x - mean) * lax.rsqrt(var + LN_EPS)
        xn = xn * gamma_ref[...] + beta_ref[...]               # (1, D) broadcast

        # ---- GELU (exact, erf-based; matches F.gelu default) ----
        xa = 0.5 * xn * (1.0 + lax.erf(xn * INV_SQRT2))
        xa_bf = xa.astype(jnp.bfloat16)                        # bf16 feed for the MXU

        # ---- fused input projection for BOTH directions: one bf16 matmul ----
        # column layout: [r z n]_fwd (0:3H) | [r z n]_bwd (3H:6H)
        bx = bx_ref[...]                                       # (1, 6H)  b_ih + (r,z of b_hh)
        if two_d:  # batch chunk is sublane-aligned -> flatten to a single 2-D MXU matmul
            gx = jnp.dot(xa_bf.reshape(T * Bc, D), wih_ref[...],
                         preferred_element_type=jnp.float32) + bx
        else:
            gx = lax.dot_general(xa_bf, wih_ref[...], (((2,), (0,)), ((), ())),
                                 preferred_element_type=jnp.float32) + bx
        gx_scr[...] = gx

        whh = whh_ref[...]                                     # (2H, 6H) block-diagonal, f32
        bhn_f = bhn_ref[:, 0:H]                                # (1, H)
        bhn_b = bhn_ref[:, H:2 * H]                            # (1, H)

        def load_gx(t):
            if two_d:
                return gx_scr[pl.ds(pl.multiple_of(t * Bc, Bc), Bc), :]
            return gx_scr[t]                                   # (Bc, 6H)

        # ---- fused bidirectional recurrence: fwd t=i and bwd t=T-1-i per step ----
        def body(i, carry):
            h_f, h_b = carry                                   # (Bc, H) each
            tf = i
            tb = T - 1 - i
            gx_f = load_gx(tf)                                 # fwd gates in cols [0, 3H)
            gx_b = load_gx(tb)                                 # bwd gates in cols [3H, 6H)

            h_cat = jnp.concatenate([h_f, h_b], axis=-1)       # (Bc, 2H)
            gh = jnp.dot(h_cat, whh, preferred_element_type=jnp.float32)  # (Bc, 6H)

            rz_f = jax.nn.sigmoid(gx_f[:, 0:2 * H] + gh[:, 0:2 * H])
            n_f = jnp.tanh(gx_f[:, 2 * H:3 * H]
                           + rz_f[:, 0:H] * (gh[:, 2 * H:3 * H] + bhn_f))
            h_f = (1.0 - rz_f[:, H:2 * H]) * n_f + rz_f[:, H:2 * H] * h_f

            rz_b = jax.nn.sigmoid(gx_b[:, 3 * H:5 * H] + gh[:, 3 * H:5 * H])
            n_b = jnp.tanh(gx_b[:, 5 * H:6 * H]
                           + rz_b[:, 0:H] * (gh[:, 5 * H:6 * H] + bhn_b))
            h_b = (1.0 - rz_b[:, H:2 * H]) * n_b + rz_b[:, H:2 * H] * h_b

            # stream each direction's hidden state straight into its output slice
            out_ref[pl.ds(tf, 1), :, 0:H] = h_f[None].astype(out_ref.dtype)
            out_ref[pl.ds(tb, 1), :, H:2 * H] = h_b[None].astype(out_ref.dtype)
            return h_f, h_b

        h0 = jnp.zeros((Bc, H), jnp.float32)
        lax.fori_loop(0, T, body, (h0, h0))
        # Dropout: module evaluated in inference mode -> identity.
        # TODO(synk): train-mode stochastic dropout (pltpu.prng_*) not emitted here.

    return kernel


def _choose_block_b(B, T, D, H, budget_bytes=24 * 1024 * 1024):
    """Largest batch chunk that fits the VMEM budget.

    Chunks must divide B and be sublane-friendly (multiple of 8, or the whole
    batch) so BlockSpec tiles stay (8,128)-aligned or full-extent.
    """
    candidates = [bc for bc in range(1, B + 1)
                  if B % bc == 0 and (bc == B or bc % 8 == 0)]
    # per batch row (fp32): double-buffered x block + gx scratch + double-buffered out block
    per_row = T * (2 * D + 6 * H + 2 * 2 * H) * 4
    fitting = [bc for bc in candidates if bc * per_row <= budget_bytes]
    return max(fitting) if fitting else min(candidates)


def bidirectional_gru(x, params, hidden_size):
    """x: (B, T, D) float32 (batch_first). Returns (B, T, 2*hidden_size) float32."""
    B, T, D = x.shape
    H = hidden_size
    Bc = _choose_block_b(B, T, D, H)
    two_d = (Bc % 8 == 0)

    # --- fuse per-direction parameters (column layout: [r z n]_fwd | [r z n]_bwd) ---
    w_ih = jnp.concatenate([params["w_ih_f"].T, params["w_ih_b"].T], axis=1)   # (D, 6H)
    w_ih = w_ih.astype(jnp.bfloat16)                                           # bf16 MXU path
    w_hh = jnp.zeros((2 * H, 6 * H), jnp.float32)
    w_hh = w_hh.at[:H, :3 * H].set(params["w_hh_f"].T)
    w_hh = w_hh.at[H:, 3 * H:].set(params["w_hh_b"].T)                         # block-diagonal

    def fused_bias(b_ih, b_hh):  # fold b_ih (all gates) + b_hh (r,z) into the projection bias
        return jnp.concatenate([b_ih[:2 * H] + b_hh[:2 * H], b_ih[2 * H:]])

    b_x = jnp.concatenate([fused_bias(params["b_ih_f"], params["b_hh_f"]),
                           fused_bias(params["b_ih_b"], params["b_hh_b"])]).reshape(1, 6 * H)
    b_hn = jnp.concatenate([params["b_hh_f"][2 * H:],
                            params["b_hh_b"][2 * H:]]).reshape(1, 2 * H)

    xt = jnp.transpose(x, (1, 0, 2))  # time-major (T, B, D): in-kernel dynamic indexing stays leading-axis
    kernel = _make_kernel(T, Bc, D, H, two_d)
    gx_shape = (T * Bc, 6 * H) if two_d else (T, Bc, 6 * H)

    out_tm = pl.pallas_call(
        kernel,
        grid=(B // Bc,),
        in_specs=[
            pl.BlockSpec((T, Bc, D), lambda b: (0, b, 0)),       # x (time-major), batch-chunked
            pl.BlockSpec((1, D), lambda b: (0, 0)),              # gamma
            pl.BlockSpec((1, D), lambda b: (0, 0)),              # beta
            pl.BlockSpec((D, 6 * H), lambda b: (0, 0)),          # fused W_ih (bf16)
            pl.BlockSpec((2 * H, 6 * H), lambda b: (0, 0)),      # block-diag W_hh
            pl.BlockSpec((1, 6 * H), lambda b: (0, 0)),          # fused projection bias
            pl.BlockSpec((1, 2 * H), lambda b: (0, 0)),          # b_hn (fwd|bwd)
        ],
        out_specs=pl.BlockSpec((T, Bc, 2 * H), lambda b: (0, b, 0)),
        out_shape=jax.ShapeDtypeStruct((T, B, 2 * H), jnp.float32),
        scratch_shapes=[pltpu.VMEM(gx_shape, jnp.float32)],
        compiler_params=pltpu.CompilerParams(
            dimension_semantics=("parallel",),
            vmem_limit_bytes=64 * 1024 * 1024),
    )(xt, params["gamma"].reshape(1, D), params["beta"].reshape(1, D),
      w_ih, w_hh, b_x, b_hn)

    return jnp.transpose(out_tm, (1, 0, 2))  # back to (B, T, 2H)


def _reference(x, params, H):
    """Pure-JAX reference of the same forward pass (for verification)."""
    xf = x.astype(jnp.float32)
    mean = jnp.mean(xf, -1, keepdims=True)
    var = jnp.mean((xf - mean) ** 2, -1, keepdims=True)
    xn = (xf - mean) / jnp.sqrt(var + LN_EPS) * params["gamma"] + params["beta"]
    xa = 0.5 * xn * (1.0 + lax.erf(xn * INV_SQRT2))

    def run(seq, w_ih, w_hh, b_ih, b_hh):  # seq: (T, B, D)
        def step(h, x_t):
            gx = x_t @ w_ih.T + b_ih
            gh = h @ w_hh.T + b_hh
            r = jax.nn.sigmoid(gx[:, :H] + gh[:, :H])
            z = jax.nn.sigmoid(gx[:, H:2 * H] + gh[:, H:2 * H])
            n = jnp.tanh(gx[:, 2 * H:] + r * gh[:, 2 * H:])
            h_new = (1 - z) * n + z * h
            return h_new, h_new
        h0 = jnp.zeros((seq.shape[1], H), jnp.float32)
        _, outs = lax.scan(step, h0, seq)
        return outs

    seq = jnp.transpose(xa, (1, 0, 2))
    of = run(seq, params["w_ih_f"], params["w_hh_f"], params["b_ih_f"], params["b_hh_f"])
    ob = run(seq[::-1], params["w_ih_b"], params["w_hh_b"], params["b_ih_b"],
             params["b_hh_b"])[::-1]
    return jnp.transpose(jnp.concatenate([of, ob], -1), (1, 0, 2))


def init_params(key, rnn_dim, hidden_size):
    H, D = hidden_size, rnn_dim
    k = 1.0 / math.sqrt(H)
    keys = jax.random.split(key, 8)
    u = lambda kk, shape: jax.random.uniform(kk, shape, jnp.float32, -k, k)
    return {
        "gamma": jnp.ones((D,), jnp.float32),
        "beta": jnp.zeros((D,), jnp.float32),
        "w_ih_f": u(keys[0], (3 * H, D)),
        "w_hh_f": u(keys[1], (3 * H, H)),
        "b_ih_f": u(keys[2], (3 * H,)),
        "b_hh_f": u(keys[3], (3 * H,)),
        "w_ih_b": u(keys[4], (3 * H, D)),
        "w_hh_b": u(keys[5], (3 * H, H)),
        "b_ih_b": u(keys[6], (3 * H,)),
        "b_hh_b": u(keys[7], (3 * H,)),
    }


if __name__ == "__main__":
    B, T, D, H = 2, 8, 16, 32  # batch, seq, rnn_dim, hidden_size (batch_first=True)
    key = jax.random.PRNGKey(0)
    kx, kp = jax.random.split(key)
    x = jax.random.normal(kx, (B, T, D), jnp.float32)
    params = init_params(kp, D, H)

    out = bidirectional_gru(x, params, H)
    out = jax.block_until_ready(out)
    assert out.shape == (B, T, 2 * H), out.shape

    ref = jax.block_until_ready(_reference(x, params, H))
    # bf16 is used for the fused input projection -> loosened tolerance vs pure-f32 reference.
    np.testing.assert_allclose(np.asarray(out), np.asarray(ref), rtol=2e-2, atol=2e-2)

    print("KERNEL_OK")
</pallas_src>

<mosaic_0001>
module attributes {stable_mosaic.version = 11 : i64} {
  func.func @kernel(%arg0: i32, %arg1: memref<8x2x16xf32, #tpu.memory_space<vmem>>, %arg2: memref<1x16xf32, #tpu.memory_space<vmem>>, %arg3: memref<1x16xf32, #tpu.memory_space<vmem>>, %arg4: memref<16x192xbf16, #tpu.memory_space<vmem>>, %arg5: memref<64x192xf32, #tpu.memory_space<vmem>>, %arg6: memref<1x192xf32, #tpu.memory_space<vmem>>, %arg7: memref<1x64xf32, #tpu.memory_space<vmem>>, %arg8: memref<8x2x64xf32, #tpu.memory_space<vmem>>, %arg9: memref<8x2x192xf32, #tpu.memory_space<vmem>>) attributes {dimension_semantics = [#tpu.dimension_semantics<parallel>], iteration_bounds = array<i64: 1>, scalar_prefetch = 0 : i64, scratch_operands = 1 : i64, tpu.core_type = #tpu.core_type<tc>, window_params = [{transform_indices = @transform_0, window_bounds = array<i64: 8, 2, 16>}, {pipeline_mode = #tpu.pipeline_mode<synchronous>, transform_indices = @transform_1, window_bounds = array<i64: 1, 16>}, {pipeline_mode = #tpu.pipeline_mode<synchronous>, transform_indices = @transform_2, window_bounds = array<i64: 1, 16>}, {pipeline_mode = #tpu.pipeline_mode<synchronous>, transform_indices = @transform_3, window_bounds = array<i64: 16, 192>}, {pipeline_mode = #tpu.pipeline_mode<synchronous>, transform_indices = @transform_4, window_bounds = array<i64: 64, 192>}, {pipeline_mode = #tpu.pipeline_mode<synchronous>, transform_indices = @transform_5, window_bounds = array<i64: 1, 192>}, {pipeline_mode = #tpu.pipeline_mode<synchronous>, transform_indices = @transform_6, window_bounds = array<i64: 1, 64>}, {transform_indices = @transform_7, window_bounds = array<i64: 8, 2, 64>}]} {
    %c0 = arith.constant 0 : index
    %c0_0 = arith.constant 0 : index
    %c0_1 = arith.constant 0 : index
    %0 = vector.load %arg1[%c0, %c0_0, %c0_1] : memref<8x2x16xf32, #tpu.memory_space<vmem>>, vector<8x2x16xf32>
    %cst = arith.constant dense<0.000000e+00> : vector<8x2xf32>
    %1 = vector.multi_reduction <add>, %0, %cst [2] : vector<8x2x16xf32> to vector<8x2xf32>
    %2 = vector.shape_cast %1 : vector<8x2xf32> to vector<8x2x1xf32>
    %cst_2 = arith.constant 1.600000e+01 : f32
    %3 = vector.broadcast %cst_2 : f32 to vector<8x2x1xf32>
    %4 = arith.divf %2, %3 : vector<8x2x1xf32>
    %5 = vector.broadcast %4 : vector<8x2x1xf32> to vector<8x2x16xf32>
    %6 = arith.subf %0, %5 : vector<8x2x16xf32>
    %7 = arith.mulf %6, %6 : vector<8x2x16xf32>
    %cst_3 = arith.constant dense<0.000000e+00> : vector<8x2xf32>
    %8 = vector.multi_reduction <add>, %7, %cst_3 [2] : vector<8x2x16xf32> to vector<8x2xf32>
    %9 = vector.shape_cast %8 : vector<8x2xf32> to vector<8x2x1xf32>
    %cst_4 = arith.constant 1.600000e+01 : f32
    %10 = vector.broadcast %cst_4 : f32 to vector<8x2x1xf32>
    %11 = arith.divf %9, %10 : vector<8x2x1xf32>
    %12 = vector.broadcast %4 : vector<8x2x1xf32> to vector<8x2x16xf32>
    %13 = arith.subf %0, %12 : vector<8x2x16xf32>
    %cst_5 = arith.constant 9.99999974E-6 : f32
    %14 = vector.broadcast %cst_5 : f32 to vector<8x2x1xf32>
    %15 = arith.addf %11, %14 : vector<8x2x1xf32>
    %16 = math.rsqrt %15 : vector<8x2x1xf32>
    %17 = vector.broadcast %16 : vector<8x2x1xf32> to vector<8x2x16xf32>
    %18 = arith.mulf %13, %17 : vector<8x2x16xf32>
    %c0_6 = arith.constant 0 : index
    %c0_7 = arith.constant 0 : index
    %19 = vector.load %arg2[%c0_6, %c0_7] : memref<1x16xf32, #tpu.memory_space<vmem>>, vector<1x16xf32>
    %20 = vector.shape_cast %19 : vector<1x16xf32> to vector<1x1x16xf32>
    %21 = vector.broadcast %20 : vector<1x1x16xf32> to vector<8x2x16xf32>
    %22 = arith.mulf %18, %21 : vector<8x2x16xf32>
    %c0_8 = arith.constant 0 : index
    %c0_9 = arith.constant 0 : index
    %23 = vector.load %arg3[%c0_8, %c0_9] : memref<1x16xf32, #tpu.memory_space<vmem>>, vector<1x16xf32>
    %24 = vector.shape_cast %23 : vector<1x16xf32> to vector<1x1x16xf32>
    %25 = vector.broadcast %24 : vector<1x1x16xf32> to vector<8x2x16xf32>
    %26 = arith.addf %22, %25 : vector<8x2x16xf32>
    %cst_10 = arith.constant 5.000000e-01 : f32
    %27 = vector.broadcast %cst_10 : f32 to vector<8x2x16xf32>
    %28 = arith.mulf %27, %26 : vector<8x2x16xf32>
    %cst_11 = arith.constant 0.707106769 : f32
    %29 = vector.broadcast %cst_11 : f32 to vector<8x2x16xf32>
    %30 = arith.mulf %26, %29 : vector<8x2x16xf32>
    %31 = math.erf %30 : vector<8x2x16xf32>
    %cst_12 = arith.constant 1.000000e+00 : f32
    %32 = vector.broadcast %cst_12 : f32 to vector<8x2x16xf32>
    %33 = arith.addf %32, %31 : vector<8x2x16xf32>
    %34 = arith.mulf %28, %33 : vector<8x2x16xf32>
    %35 = arith.truncf %34 : vector<8x2x16xf32> to vector<8x2x16xbf16>
    %c0_13 = arith.constant 0 : index
    %c0_14 = arith.constant 0 : index
    %36 = vector.load %arg6[%c0_13, %c0_14] : memref<1x192xf32, #tpu.memory_space<vmem>>, vector<1x192xf32>
    %c0_15 = arith.constant 0 : index
    %c0_16 = arith.constant 0 : index
    %37 = vector.load %arg4[%c0_15, %c0_16] : memref<16x192xbf16, #tpu.memory_space<vmem>>, vector<16x192xbf16>
    %cst_17 = arith.constant dense<0.000000e+00> : vector<8x2x192xf32>
    %38 = tpu.matmul %35, %37, %cst_17 {dimension_numbers = #tpu.dot_dimension_numbers<[2], [0], [0, 1], [1], [0, 0, 0, 1, 1, 1], [], []>} : vector<8x2x16xbf16>, vector<16x192xbf16>, vector<8x2x192xf32> -> vector<8x2x192xf32>
    %39 = vector.shape_cast %36 : vector<1x192xf32> to vector<1x1x192xf32>
    %40 = vector.broadcast %39 : vector<1x1x192xf32> to vector<8x2x192xf32>
    %41 = arith.addf %38, %40 : vector<8x2x192xf32>
    %c0_18 = arith.constant 0 : index
    %c0_19 = arith.constant 0 : index
    %c0_20 = arith.constant 0 : index
    %42 = vector.load %arg9[%c0_18, %c0_19, %c0_20] : memref<8x2x192xf32, #tpu.memory_space<vmem>>, vector<8x2x192xf32>
    tpu.vector_store %arg9[%c0_18, %c0_19, %c0_20], %41 {strides = array<i32>} : memref<8x2x192xf32, #tpu.memory_space<vmem>>, vector<8x2x192xf32>,
    %c0_21 = arith.constant 0 : index
    %c0_22 = arith.constant 0 : index
    %43 = vector.load %arg5[%c0_21, %c0_22] : memref<64x192xf32, #tpu.memory_space<vmem>>, vector<64x192xf32>
    %c0_23 = arith.constant 0 : index
    %c0_24 = arith.constant 0 : index
    %44 = vector.load %arg7[%c0_23, %c0_24] : memref<1x64xf32, #tpu.memory_space<vmem>>, vector<1x32xf32>
    %c0_25 = arith.constant 0 : index
    %c32 = arith.constant 32 : index
    %45 = vector.load %arg7[%c0_25, %c32] : memref<1x64xf32, #tpu.memory_space<vmem>>, vector<1x32xf32>
    %cst_26 = arith.constant 0.000000e+00 : f32
    %46 = vector.broadcast %cst_26 : f32 to vector<2x32xf32>
    %c0_i32 = arith.constant 0 : i32
    %c8_i32 = arith.constant 8 : i32
    %47 = arith.addi %c0_i32, %c8_i32 : i32
    %c1_i32 = arith.constant 1 : i32
    %48:2 = scf.for %arg10 = %c0_i32 to %47 step %c1_i32 iter_args(%arg11 = %46, %arg12 = %46) -> (vector<2x32xf32>, vector<2x32xf32>)  : i32 {
      %c7_i32 = arith.constant 7 : i32
      %49 = arith.subi %c7_i32, %arg10 : i32
      %50 = arith.index_cast %arg10 : i32 to index
      %c0_28 = arith.constant 0 : index
      %c0_29 = arith.constant 0 : index
      %51 = vector.load %arg9[%50, %c0_28, %c0_29] : memref<8x2x192xf32, #tpu.memory_space<vmem>>, vector<1x2x192xf32>
      %52 = vector.shape_cast %51 : vector<1x2x192xf32> to vector<2x192xf32>
      %53 = arith.index_cast %49 : i32 to index
      %c0_30 = arith.constant 0 : index
      %c0_31 = arith.constant 0 : index
      %54 = vector.load %arg9[%53, %c0_30, %c0_31] : memref<8x2x192xf32, #tpu.memory_space<vmem>>, vector<1x2x192xf32>
      %55 = vector.shape_cast %54 : vector<1x2x192xf32> to vector<2x192xf32>
      %56 = tpu.concatenate %arg11, %arg12 in 1 : vector<2x32xf32>, vector<2x32xf32> -> vector<2x64xf32>
      %cst_32 = arith.constant dense<0.000000e+00> : vector<2x192xf32>
      %57 = tpu.matmul %56, %43, %cst_32 {dimension_numbers = #tpu.dot_dimension_numbers<[1], [0], [0], [1], [0, 0, 1, 1], [], []>} : vector<2x64xf32>, vector<64x192xf32>, vector<2x192xf32> -> vector<2x192xf32>
      %58 = vector.extract_strided_slice %52 {offsets = [0, 0], sizes = [2, 64], strides = [1, 1]} : vector<2x192xf32> to vector<2x64xf32>
      %59 = vector.extract_strided_slice %57 {offsets = [0, 0], sizes = [2, 64], strides = [1, 1]} : vector<2x192xf32> to vector<2x64xf32>
      %60 = arith.addf %58, %59 : vector<2x64xf32>
      %61 = arith.negf %60 : vector<2x64xf32>
      %62 = math.exp %61 : vector<2x64xf32>
      %cst_33 = arith.constant 1.000000e+00 : f32
      %63 = vector.broadcast %cst_33 : f32 to vector<2x64xf32>
      %64 = arith.addf %63, %62 : vector<2x64xf32>
      %65 = arith.divf %63, %64 : vector<2x64xf32>
      %66 = vector.extract_strided_slice %52 {offsets = [0, 64], sizes = [2, 32], strides = [1, 1]} : vector<2x192xf32> to vector<2x32xf32>
      %67 = vector.extract_strided_slice %65 {offsets = [0, 0], sizes = [2, 32], strides = [1, 1]} : vector<2x64xf32> to vector<2x32xf32>
      %68 = vector.extract_strided_slice %57 {offsets = [0, 64], sizes = [2, 32], strides = [1, 1]} : vector<2x192xf32> to vector<2x32xf32>
      %69 = vector.broadcast %44 : vector<1x32xf32> to vector<2x32xf32>
      %70 = arith.addf %68, %69 : vector<2x32xf32>
      %71 = arith.mulf %67, %70 : vector<2x32xf32>
      %72 = arith.addf %66, %71 : vector<2x32xf32>
      %73 = math.tanh %72 : vector<2x32xf32>
      %74 = vector.extract_strided_slice %65 {offsets = [0, 32], sizes = [2, 32], strides = [1, 1]} : vector<2x64xf32> to vector<2x32xf32>
      %cst_34 = arith.constant 1.000000e+00 : f32
      %75 = vector.broadcast %cst_34 : f32 to vector<2x32xf32>
      %76 = arith.subf %75, %74 : vector<2x32xf32>
      %77 = arith.mulf %76, %73 : vector<2x32xf32>
      %78 = vector.extract_strided_slice %65 {offsets = [0, 32], sizes = [2, 32], strides = [1, 1]} : vector<2x64xf32> to vector<2x32xf32>
      %79 = arith.mulf %78, %arg11 : vector<2x32xf32>
      %80 = arith.addf %77, %79 : vector<2x32xf32>
      %81 = vector.extract_strided_slice %55 {offsets = [0, 96], sizes = [2, 64], strides = [1, 1]} : vector<2x192xf32> to vector<2x64xf32>
      %82 = vector.extract_strided_slice %57 {offsets = [0, 96], sizes = [2, 64], strides = [1, 1]} : vector<2x192xf32> to vector<2x64xf32>
      %83 = arith.addf %81, %82 : vector<2x64xf32>
      %84 = arith.negf %83 : vector<2x64xf32>
      %85 = math.exp %84 : vector<2x64xf32>
      %cst_35 = arith.constant 1.000000e+00 : f32
      %86 = vector.broadcast %cst_35 : f32 to vector<2x64xf32>
      %87 = arith.addf %86, %85 : vector<2x64xf32>
      %88 = arith.divf %86, %87 : vector<2x64xf32>
      %89 = vector.extract_strided_slice %55 {offsets = [0, 160], sizes = [2, 32], strides = [1, 1]} : vector<2x192xf32> to vector<2x32xf32>
      %90 = vector.extract_strided_slice %88 {offsets = [0, 0], sizes = [2, 32], strides = [1, 1]} : vector<2x64xf32> to vector<2x32xf32>
      %91 = vector.extract_strided_slice %57 {offsets = [0, 160], sizes = [2, 32], strides = [1, 1]} : vector<2x192xf32> to vector<2x32xf32>
      %92 = vector.broadcast %45 : vector<1x32xf32> to vector<2x32xf32>
      %93 = arith.addf %91, %92 : vector<2x32xf32>
      %94 = arith.mulf %90, %93 : vector<2x32xf32>
      %95 = arith.addf %89, %94 : vector<2x32xf32>
      %96 = math.tanh %95 : vector<2x32xf32>
      %97 = vector.extract_strided_slice %88 {offsets = [0, 32], sizes = [2, 32], strides = [1, 1]} : vector<2x64xf32> to vector<2x32xf32>
      %cst_36 = arith.constant 1.000000e+00 : f32
      %98 = vector.broadcast %cst_36 : f32 to vector<2x32xf32>
      %99 = arith.subf %98, %97 : vector<2x32xf32>
      %100 = arith.mulf %99, %96 : vector<2x32xf32>
      %101 = vector.extract_strided_slice %88 {offsets = [0, 32], sizes = [2, 32], strides = [1, 1]} : vector<2x64xf32> to vector<2x32xf32>
      %102 = arith.mulf %101, %arg12 : vector<2x32xf32>
      %103 = arith.addf %100, %102 : vector<2x32xf32>
      %104 = vector.shape_cast %80 : vector<2x32xf32> to vector<1x2x32xf32>
      %105 = arith.index_cast %arg10 : i32 to index
      %c0_37 = arith.constant 0 : index
      %c0_38 = arith.constant 0 : index
      %106 = vector.load %arg8[%105, %c0_37, %c0_38] : memref<8x2x64xf32, #tpu.memory_space<vmem>>, vector<1x2x32xf32>
      tpu.vector_store %arg8[%105, %c0_37, %c0_38], %104 {strides = array<i32>} : memref<8x2x64xf32, #tpu.memory_space<vmem>>, vector<1x2x32xf32>,
      %107 = vector.shape_cast %103 : vector<2x32xf32> to vector<1x2x32xf32>
      %108 = arith.index_cast %49 : i32 to index
      %c0_39 = arith.constant 0 : index
      %c32_40 = arith.constant 32 : index
      %109 = vector.load %arg8[%108, %c0_39, %c32_40] : memref<8x2x64xf32, #tpu.memory_space<vmem>>, vector<1x2x32xf32>
      tpu.vector_store %arg8[%108, %c0_39, %c32_40], %107 {strides = array<i32>} : memref<8x2x64xf32, #tpu.memory_space<vmem>>, vector<1x2x32xf32>,
      scf.yield %80, %103 : vector<2x32xf32>, vector<2x32xf32>
    }
    %c8_i32_27 = arith.constant 8 : i32
    return
  }
  func.func @transform_0(%arg0: i32) -> (i32, i32, i32) {
    %c0_i32 = arith.constant 0 : i32
    %c0_i32_0 = arith.constant 0 : i32
    %c0_i32_1 = arith.constant 0 : i32
    return %c0_i32, %arg0, %c0_i32_0 : i32, i32, i32
  }
  func.func @transform_1(%arg0: i32) -> (i32, i32) {
    %c0_i32 = arith.constant 0 : i32
    %c0_i32_0 = arith.constant 0 : i32
    %c0_i32_1 = arith.constant 0 : i32
    return %c0_i32, %c0_i32_0 : i32, i32
  }
  func.func @transform_2(%arg0: i32) -> (i32, i32) {
    %c0_i32 = arith.constant 0 : i32
    %c0_i32_0 = arith.constant 0 : i32
    %c0_i32_1 = arith.constant 0 : i32
    return %c0_i32, %c0_i32_0 : i32, i32
  }
  func.func @transform_3(%arg0: i32) -> (i32, i32) {
    %c0_i32 = arith.constant 0 : i32
    %c0_i32_0 = arith.constant 0 : i32
    %c0_i32_1 = arith.constant 0 : i32
    return %c0_i32, %c0_i32_0 : i32, i32
  }
  func.func @transform_4(%arg0: i32) -> (i32, i32) {
    %c0_i32 = arith.constant 0 : i32
    %c0_i32_0 = arith.constant 0 : i32
    %c0_i32_1 = arith.constant 0 : i32
    return %c0_i32, %c0_i32_0 : i32, i32
  }
  func.func @transform_5(%arg0: i32) -> (i32, i32) {
    %c0_i32 = arith.constant 0 : i32
    %c0_i32_0 = arith.constant 0 : i32
    %c0_i32_1 = arith.constant 0 : i32
    return %c0_i32, %c0_i32_0 : i32, i32
  }
  func.func @transform_6(%arg0: i32) -> (i32, i32) {
    %c0_i32 = arith.constant 0 : i32
    %c0_i32_0 = arith.constant 0 : i32
    %c0_i32_1 = arith.constant 0 : i32
    return %c0_i32, %c0_i32_0 : i32, i32
  }
  func.func @transform_7(%arg0: i32) -> (i32, i32, i32) {
    %c0_i32 = arith.constant 0 : i32
    %c0_i32_0 = arith.constant 0 : i32
    %c0_i32_1 = arith.constant 0 : i32
    return %c0_i32, %arg0, %c0_i32_0 : i32, i32, i32
  }
}

</mosaic_0001>

<llo_original>
// kernel: tpu_custom_call.1
$region0: #{tpu_custom_call.1}
  #allocation0 [shape = 'u32[]', space=smem, size = 0x4, offset = 0x4, fixed_abs, tag = 'smem constant byte address 0x4 - core index']
  #allocation1 [shape = 'u32[144,128]{1,0:T(1,128)}', space=vmem, size = 0x12000, scoped, tag = 'internal scratch']
  #allocation2 [shape = 'f32[8,2,192]{2,1,0:T(2,128)}', space=vmem, size = 0x4000, scoped, tag = 'scratch operand']
  %s0 = inlined_call_operand.hbm [shape: f32[8,2,16], index: 0, kind: input, shape index: {}]
  %s1 = inlined_call_operand.hbm [shape: f32[1,16], index: 1, kind: input, shape index: {}]
  %s2 = inlined_call_operand.hbm [shape: f32[1,16], index: 2, kind: input, shape index: {}]
  %s3 = inlined_call_operand.hbm [shape: bf16[16,192], index: 3, kind: input, shape index: {}]
  %s4 = inlined_call_operand.hbm [shape: f32[64,192], index: 4, kind: input, shape index: {}]
  %s5 = inlined_call_operand.hbm [shape: f32[1,192], index: 5, kind: input, shape index: {}]
  %s6 = inlined_call_operand.hbm [shape: f32[1,64], index: 6, kind: input, shape index: {}]
  %s7 = inlined_call_operand.hbm [shape: f32[8,2,64], index: 7, kind: output, shape index: {}]
  %s8 = sld [smem:[#allocation0]]
  $region73: #{tpu_custom_call.1} parent=0
    _
  %s10 = ssub.s32 1, %s8
  %s11 = scalar_select 0, %s10, %s8
  $region1: #{tpu_custom_call.1} parent=0
    #allocation3 [shape = 'u8[8192]{0}', space=vmem, size = 0x2000, scoped, tag = 'input window, operand 0, single buffered']
    #allocation4 [shape = 's32[1]{0}', space=sflag, size = 0x4, scoped, tag = 'scoped memory for tpu_custom_call.1']
    #allocation5 [shape = 's32[1]{0}', space=sflag, size = 0x4, scoped, tag = 'scoped memory for tpu_custom_call.1']
    #allocation6 [shape = 'u8[512]{0}', space=vmem, size = 0x400, scoped, tag = 'input window, operand 1, single buffered']
    #allocation7 [shape = 's32[1]{0}', space=sflag, size = 0x4, scoped, tag = 'scoped memory for tpu_custom_call.1']
    #allocation8 [shape = 'u8[512]{0}', space=vmem, size = 0x400, scoped, tag = 'input window, operand 2, single buffered']
    #allocation9 [shape = 'u8[8192]{0}', space=vmem, size = 0x2000, scoped, tag = 'input window, operand 3, single buffered']
    #allocation10 [shape = 's32[1]{0}', space=sflag, size = 0x4, scoped, tag = 'scoped memory for tpu_custom_call.1']
    #allocation11 [shape = 'u8[65536]{0}', space=vmem, size = 0x10000, scoped, tag = 'input window, operand 4, single buffered']
    #allocation12 [shape = 'u8[1024]{0}', space=vmem, size = 0x400, scoped, tag = 'input window, operand 5, single buffered']
    #allocation13 [shape = 's32[1]{0}', space=sflag, size = 0x4, scoped, tag = 'scoped memory for tpu_custom_call.1']
    #allocation14 [shape = 'u8[512]{0}', space=vmem, size = 0x400, scoped, tag = 'input window, operand 6, single buffered']
    #allocation15 [shape = 'u8[8192]{0}', space=vmem, size = 0x2000, scoped, tag = 'output window, operand 0, single buffered']
    %12 = vsyncpa [#allocation4], 0
    %13 = vsyncpa [#allocation7], 0
    %14 = vsyncpa [#allocation10], 0
    %15 = vsyncpa [#allocation13], 0
    %16 = vsyncpa [#allocation5], 0
    // Predicated region
    $region2: #{tpu_custom_call.1} parent=1 // pred_check
      _
    $region3: #{tpu_custom_call.1} parent=1 // pred_check_branch
      %18 = sbr.rel (0) target = $region5
    $region4: #{tpu_custom_call.1} parent=1 // pred_region
      %s20 = ssub.s32 256, 256
      %21 = vsyncadd [#allocation4], %s20
      %s22 = sshll.u32 [#allocation3], 4
      %s23 = int_to_ptr.vmem [resolvable:$true] %s22
      %28 = dma.hbm_to_vmem [thread:$0]  %s0, 256, %s23, [#allocation4], 32, 32, 2
    $region5: #{tpu_custom_call.1} parent=1 // pred_fallthru
      _
    // Predicated region
    $region6: #{tpu_custom_call.1} parent=1 // pred_check
      _
    $region7: #{tpu_custom_call.1} parent=1 // pred_check_branch
      %30 = sbr.rel (0) target = $region9
    $region8: #{tpu_custom_call.1} parent=1 // pred_region
      %s32 = ssub.s32 16, 16
      %33 = vsyncadd [#allocation7], %s32
      %s35 = sshll.u32 [#allocation6], 4
      %s36 = int_to_ptr.vmem [resolvable:$true] %s35
      %38 = dma.hbm_to_vmem [thread:$0]  %s1, 16, %s36, [#allocation7]
    $region9: #{tpu_custom_call.1} parent=1 // pred_fallthru
      _
    // Predicated region
    $region10: #{tpu_custom_call.1} parent=1 // pred_check
      _
    $region11: #{tpu_custom_call.1} parent=1 // pred_check_branch
      %40 = sbr.rel (0) target = $region13
    $region12: #{tpu_custom_call.1} parent=1 // pred_region
      %s42 = ssub.s32 16, 16
      %43 = vsyncadd [#allocation7], %s42
      %s45 = sshll.u32 [#allocation8], 4
      %s46 = int_to_ptr.vmem [resolvable:$true] %s45
      %48 = dma.hbm_to_vmem [thread:$0]  %s2, 16, %s46, [#allocation7]
    $region13: #{tpu_custom_call.1} parent=1 // pred_fallthru
      _
    // Predicated region
    $region14: #{tpu_custom_call.1} parent=1 // pred_check
      _
    $region15: #{tpu_custom_call.1} parent=1 // pred_check_branch
      %50 = sbr.rel (0) target = $region17
    $region16: #{tpu_custom_call.1} parent=1 // pred_region
      %s52 = ssub.s32 256, 256
      %53 = vsyncadd [#allocation10], %s52
      %s54 = sshll.u32 [#allocation9], 4
      %s55 = int_to_ptr.vmem [resolvable:$true] %s54
      %60 = dma.hbm_to_vmem [thread:$0]  %s3, 256, %s55, [#allocation10], 128, 128, 8
    $region17: #{tpu_custom_call.1} parent=1 // pred_fallthru
      _
    // Predicated region
    $region18: #{tpu_custom_call.1} parent=1 // pred_check
      _
    $region19: #{tpu_custom_call.1} parent=1 // pred_check_branch
      %62 = sbr.rel (0) target = $region21
    $region20: #{tpu_custom_call.1} parent=1 // pred_region
      %s64 = ssub.s32 2048, 2048
      %65 = vsyncadd [#allocation10], %s64
      %s66 = sshll.u32 [#allocation11], 4
      %s67 = int_to_ptr.vmem [resolvable:$true] %s66
      %72 = dma.hbm_to_vmem [thread:$0]  %s4, 2048, %s67, [#allocation10], 256, 256, 16
    $region21: #{tpu_custom_call.1} parent=1 // pred_fallthru
      _
    // Predicated region
    $region22: #{tpu_custom_call.1} parent=1 // pred_check
      _
    $region23: #{tpu_custom_call.1} parent=1 // pred_check_branch
      %74 = sbr.rel (0) target = $region25
    $region24: #{tpu_custom_call.1} parent=1 // pred_region
      %s76 = ssub.s32 32, 32
      %77 = vsyncadd [#allocation13], %s76
      %s79 = sshll.u32 [#allocation12], 4
      %s80 = int_to_ptr.vmem [resolvable:$true] %s79
      %82 = dma.hbm_to_vmem [thread:$0]  %s5, 32, %s80, [#allocation13]
    $region25: #{tpu_custom_call.1} parent=1 // pred_fallthru
      _
    // Predicated region
    $region26: #{tpu_custom_call.1} parent=1 // pred_check
      _
    $region27: #{tpu_custom_call.1} parent=1 // pred_check_branch
      %84 = sbr.rel (0) target = $region29
    $region28: #{tpu_custom_call.1} parent=1 // pred_region
      %s86 = ssub.s32 16, 16
      %87 = vsyncadd [#allocation13], %s86
      %s89 = sshll.u32 [#allocation14], 4
      %s90 = int_to_ptr.vmem [resolvable:$true] %s89
      %92 = dma.hbm_to_vmem [thread:$0]  %s6, 16, %s90, [#allocation13]
    $region29: #{tpu_custom_call.1} parent=1 // pred_fallthru
      _
    // Predicated region
    $region30: #{tpu_custom_call.1} parent=1 // pred_check
      _
    $region31: #{tpu_custom_call.1} parent=1 // pred_check_branch
      %94 = sbr.rel (0) target = $region33
    $region32: #{tpu_custom_call.1} parent=1 // pred_region
      %95 = dma.done [#allocation4], 256
    $region33: #{tpu_custom_call.1} parent=1 // pred_fallthru
      _
    // Predicated region
    $region34: #{tpu_custom_call.1} parent=1 // pred_check
      _
    $region35: #{tpu_custom_call.1} parent=1 // pred_check_branch
      %97 = sbr.rel (0) target = $region37
    $region36: #{tpu_custom_call.1} parent=1 // pred_region
      %98 = dma.done [#allocation7], 16
    $region37: #{tpu_custom_call.1} parent=1 // pred_fallthru
      _
    // Predicated region
    $region38: #{tpu_custom_call.1} parent=1 // pred_check
      _
    $region39: #{tpu_custom_call.1} parent=1 // pred_check_branch
      %100 = sbr.rel (0) target = $region41
    $region40: #{tpu_custom_call.1} parent=1 // pred_region
      %101 = dma.done [#allocation7], 16
    $region41: #{tpu_custom_call.1} parent=1 // pred_fallthru
      _
    // Predicated region
    $region42: #{tpu_custom_call.1} parent=1 // pred_check
      _
    $region43: #{tpu_custom_call.1} parent=1 // pred_check_branch
      %103 = sbr.rel (0) target = $region45
    $region44: #{tpu_custom_call.1} parent=1 // pred_region
      %104 = dma.done [#allocation10], 256
    $region45: #{tpu_custom_call.1} parent=1 // pred_fallthru
      _
    // Predicated region
    $region46: #{tpu_custom_call.1} parent=1 // pred_check
      _
    $region47: #{tpu_custom_call.1} parent=1 // pred_check_branch
      %106 = sbr.rel (0) target = $region49
    $region48: #{tpu_custom_call.1} parent=1 // pred_region
      %107 = dma.done [#allocation10], 2048
    $region49: #{tpu_custom_call.1} parent=1 // pred_fallthru
      _
    // Predicated region
    $region50: #{tpu_custom_call.1} parent=1 // pred_check
      _
    $region51: #{tpu_custom_call.1} parent=1 // pred_check_branch
      %109 = sbr.rel (0) target = $region53
    $region52: #{tpu_custom_call.1} parent=1 // pred_region
      %110 = dma.done [#allocation13], 32
    $region53: #{tpu_custom_call.1} parent=1 // pred_fallthru
      _
    // Predicated region
    $region54: #{tpu_custom_call.1} parent=1 // pred_check
      _
    $region55: #{tpu_custom_call.1} parent=1 // pred_check_branch
      %112 = sbr.rel (0) target = $region57
    $region56: #{tpu_custom_call.1} parent=1 // pred_region
      %113 = dma.done [#allocation13], 16
    $region57: #{tpu_custom_call.1} parent=1 // pred_fallthru
      _
    %v115 = vld [vmem:[#allocation3] sm:$0x3]
    %v116 = vld [vmem:[#allocation3 + $0x2] sm:$0x3]
    %v117 = vld [vmem:[#allocation3 + $0x4] sm:$0x3]
    %v118 = vld [vmem:[#allocation3 + $0x6] sm:$0x3]
    %v119 = vld [vmem:[#allocation3 + $0x8] sm:$0x3]
    %v120 = vld [vmem:[#allocation3 + $0xa] sm:$0x3]
    %v121 = vld [vmem:[#allocation3 + $0xc] sm:$0x3]
    %v122 = vld [vmem:[#allocation3 + $0xe] sm:$0x3]
    %vm123 = vcmask 123904
    %v124 = vsel %vm123, %v115, 0.0
    %125 = vadd.xlane.f32.xlu0 %v124
    %v126 = vpop.xlane.xlu0 %125
    %v127 = vsel %vm123, %v116, 0.0
    %128 = vadd.xlane.f32.xlu0 %v127
    %v129 = vpop.xlane.xlu0 %128
    %v130 = vsel %vm123, %v117, 0.0
    %131 = vadd.xlane.f32.xlu0 %v130
    %v132 = vpop.xlane.xlu0 %131
    %v133 = vsel %vm123, %v118, 0.0
    %134 = vadd.xlane.f32.xlu0 %v133
    %v135 = vpop.xlane.xlu0 %134
    %v136 = vsel %vm123, %v119, 0.0
    %137 = vadd.xlane.f32.xlu0 %v136
    %v138 = vpop.xlane.xlu0 %137
    %v139 = vsel %vm123, %v120, 0.0
    %140 = vadd.xlane.f32.xlu0 %v139
    %v141 = vpop.xlane.xlu0 %140
    %v142 = vsel %vm123, %v121, 0.0
    %143 = vadd.xlane.f32.xlu0 %v142
    %v144 = vpop.xlane.xlu0 %143
    %v145 = vsel %vm123, %v122, 0.0
    %146 = vadd.xlane.f32.xlu0 %v145
    %v147 = vpop.xlane.xlu0 %146
    %v148 = vrcp.pop 16.0
    %v149 = vmul.f32 %v126, %v148
    %v150 = vmul.f32 %v129, %v148
    %v151 = vmul.f32 %v132, %v148
    %v152 = vmul.f32 %v135, %v148
    %v153 = vmul.f32 %v138, %v148
    %v154 = vmul.f32 %v141, %v148
    %v155 = vmul.f32 %v144, %v148
    %v156 = vmul.f32 %v147, %v148
    %v157 = vsub.f32 %v115, %v149
    %v158 = vsub.f32 %v116, %v150
    %v159 = vsub.f32 %v117, %v151
    %v160 = vsub.f32 %v118, %v152
    %v161 = vsub.f32 %v119, %v153
    %v162 = vsub.f32 %v120, %v154
    %v163 = vsub.f32 %v121, %v155
    %v164 = vsub.f32 %v122, %v156
    %v165 = vmul.f32 %v157, %v157
    %v166 = vmul.f32 %v158, %v158
    %v167 = vmul.f32 %v159, %v159
    %v168 = vmul.f32 %v160, %v160
    %v169 = vmul.f32 %v161, %v161
    %v170 = vmul.f32 %v162, %v162
    %v171 = vmul.f32 %v163, %v163
    %v172 = vmul.f32 %v164, %v164
    %v173 = vsel %vm123, %v165, 0.0
    %174 = vadd.xlane.f32.xlu0 %v173
    %v175 = vpop.xlane.xlu0 %174
    %v176 = vsel %vm123, %v166, 0.0
    %177 = vadd.xlane.f32.xlu0 %v176
    %v178 = vpop.xlane.xlu0 %177
    %v179 = vsel %vm123, %v167, 0.0
    %180 = vadd.xlane.f32.xlu0 %v179
    %v181 = vpop.xlane.xlu0 %180
    %v182 = vsel %vm123, %v168, 0.0
    %183 = vadd.xlane.f32.xlu0 %v182
    %v184 = vpop.xlane.xlu0 %183
    %v185 = vsel %vm123, %v169, 0.0
    %186 = vadd.xlane.f32.xlu0 %v185
    %v187 = vpop.xlane.xlu0 %186
    %v188 = vsel %vm123, %v170, 0.0
    %189 = vadd.xlane.f32.xlu0 %v188
    %v190 = vpop.xlane.xlu0 %189
    %v191 = vsel %vm123, %v171, 0.0
    %192 = vadd.xlane.f32.xlu0 %v191
    %v193 = vpop.xlane.xlu0 %192
    %v194 = vsel %vm123, %v172, 0.0
    %195 = vadd.xlane.f32.xlu0 %v194
    %v196 = vpop.xlane.xlu0 %195
    %v197 = vmul.f32 %v175, %v148
    %v198 = vmul.f32 %v178, %v148
    %v199 = vmul.f32 %v181, %v148
    %v200 = vmul.f32 %v184, %v148
    %v201 = vmul.f32 %v187, %v148
    %v202 = vmul.f32 %v190, %v148
    %v203 = vmul.f32 %v193, %v148
    %v204 = vmul.f32 %v196, %v148
    %v205 = vadd.f32 %v197, 1e-05
    %v206 = vadd.f32 %v198, 1e-05
    %v207 = vadd.f32 %v199, 1e-05
    %v208 = vadd.f32 %v200, 1e-05
    %v209 = vadd.f32 %v201, 1e-05
    %v210 = vadd.f32 %v202, 1e-05
    %v211 = vadd.f32 %v203, 1e-05
    %v212 = vadd.f32 %v204, 1e-05
    %v213 = vrsqrt.pop %v205
    %v214 = vrsqrt.pop %v206
    %v215 = vrsqrt.pop %v207
    %v216 = vrsqrt.pop %v208
    %v217 = vrsqrt.pop %v209
    %v218 = vrsqrt.pop %v210
    %v219 = vrsqrt.pop %v211
    %v220 = vrsqrt.pop %v212
    %v221 = vmul.f32 %v157, %v213
    %v222 = vmul.f32 %v158, %v214
    %v223 = vmul.f32 %v159, %v215
    %v224 = vmul.f32 %v160, %v216
    %v225 = vmul.f32 %v161, %v217
    %v226 = vmul.f32 %v162, %v218
    %v227 = vmul.f32 %v163, %v219
    %v228 = vmul.f32 %v164, %v220
    %v229 = vld [vmem:[#allocation6] sm:$0x1]
    %v231 = vlaneseq
    %v232 = vshrl.u32 %v231, 7
    %v233 = vsub.s32 0, %v232
    %v234 = vrot.slane %v229, %v233
    %v236 = vmul.f32 %v221, %v234
    %v237 = vmul.f32 %v222, %v234
    %v238 = vmul.f32 %v223, %v234
    %v239 = vmul.f32 %v224, %v234
    %v240 = vmul.f32 %v225, %v234
    %v241 = vmul.f32 %v226, %v234
    %v242 = vmul.f32 %v227, %v234
    %v243 = vmul.f32 %v228, %v234
    %v244 = vld [vmem:[#allocation8] sm:$0x1]
    %v246 = vlaneseq
    %v247 = vshrl.u32 %v246, 7
    %v248 = vsub.s32 0, %v247
    %v249 = vrot.slane %v244, %v248
    %v251 = vadd.f32 %v236, %v249
    %v252 = vadd.f32 %v237, %v249
    %v253 = vadd.f32 %v238, %v249
    %v254 = vadd.f32 %v239, %v249
    %v255 = vadd.f32 %v240, %v249
    %v256 = vadd.f32 %v241, %v249
    %v257 = vadd.f32 %v242, %v249
    %v258 = vadd.f32 %v243, %v249
    %v259 = vmul.f32 %v251, 0.5
    %v260 = vmul.f32 %v252, 0.5
    %v261 = vmul.f32 %v253, 0.5
    %v262 = vmul.f32 %v254, 0.5
    %v263 = vmul.f32 %v255, 0.5
    %v264 = vmul.f32 %v256, 0.5
    %v265 = vmul.f32 %v257, 0.5
    %v266 = vmul.f32 %v258, 0.5
    %v267 = vmul.f32 %v251, 0.70710677
    %v268 = vmul.f32 %v252, 0.70710677
    %v269 = vmul.f32 %v253, 0.70710677
    %v270 = vmul.f32 %v254, 0.70710677
    %v271 = vmul.f32 %v255, 0.70710677
    %v272 = vmul.f32 %v256, 0.70710677
    %v273 = vmul.f32 %v257, 0.70710677
    %v274 = vmul.f32 %v258, 0.70710677
    %v275 = verf.f32.pop %v267
    %v276 = verf.f32.pop %v268
    %v277 = verf.f32.pop %v269
    %v278 = verf.f32.pop %v270
    %v279 = verf.f32.pop %v271
    %v280 = verf.f32.pop %v272
    %v281 = verf.f32.pop %v273
    %v282 = verf.f32.pop %v274
    %v283 = vadd.f32 %v275, 1.0
    %v284 = vadd.f32 %v276, 1.0
    %v285 = vadd.f32 %v277, 1.0
    %v286 = vadd.f32 %v278, 1.0
    %v287 = vadd.f32 %v279, 1.0
    %v288 = vadd.f32 %v280, 1.0
    %v289 = vadd.f32 %v281, 1.0
    %v290 = vadd.f32 %v282, 1.0
    %v291 = vmul.f32 %v259, %v283
    %v292 = vmul.f32 %v260, %v284
    %v293 = vmul.f32 %v261, %v285
    %v294 = vmul.f32 %v262, %v286
    %v295 = vmul.f32 %v263, %v287
    %v296 = vmul.f32 %v264, %v288
    %v297 = vmul.f32 %v265, %v289
    %v298 = vmul.f32 %v266, %v290
    %v299 = vpack.c.bf16 %v291, %v291
    %v300 = vpack.c.bf16 %v292, %v292
    %v301 = vpack.c.bf16 %v293, %v293
    %v302 = vpack.c.bf16 %v294, %v294
    %v303 = vpack.c.bf16 %v295, %v295
    %v304 = vpack.c.bf16 %v296, %v296
    %v305 = vpack.c.bf16 %v297, %v297
    %v306 = vpack.c.bf16 %v298, %v298
    %v307 = vld [vmem:[#allocation12] sm:$0x3]
    %v308 = vld [vmem:[#allocation9] sm:$0xff]
    %v309 = vld [vmem:[#allocation9 + $0x8] sm:$0xff]
    %v311 = vlaneseq
    %v312 = vshrl.u32 %v311, 7
    %v313 = vsub.s32 0, %v312
    %v314 = vrot.slane %v307, %v313
    %v315 = vlaneseq
    %v316 = vshrl.u32 %v315, 7
    %v317 = vsub.s32 1, %v316
    %v318 = vrot.slane %v307, %v317
    %v319 = vcombine.low %v314, %v318
    %v321 = vunpack.c.l.s4 1983009808
    %v322 = vunpack.c.0.s8 %v321
    %v323 = vlaneseq
    %v324 = vshrl.u32 %v323, 7
    %v325 = vsub.s32 %v322, %v324
    %v326 = vrot.slane %v319, %v325
    %v335 = vcombine.low %v299, %v300
    %v336 = vcombine.low %v301, %v302
    %v337 = vcombine.low %v303, %v304
    %v338 = vcombine.low %v305, %v306
    %v340 = vunpack.c.l.s4 1966171168
    %v341 = vunpack.c.0.s8 %v340
    %v342 = vlaneseq
    %v343 = vshrl.u32 %v342, 7
    %v344 = vsub.s32 %v341, %v343
    %v345 = vrot.slane %v335, %v344
    %v347 = vunpack.c.l.s4 1966171168
    %v348 = vunpack.c.0.s8 %v347
    %v349 = vlaneseq
    %v350 = vshrl.u32 %v349, 7
    %v351 = vsub.s32 %v348, %v350
    %v352 = vrot.slane %v336, %v351
    %v354 = vunpack.c.l.s4 1966171168
    %v355 = vunpack.c.0.s8 %v354
    %v356 = vlaneseq
    %v357 = vshrl.u32 %v356, 7
    %v358 = vsub.s32 %v355, %v357
    %v359 = vrot.slane %v337, %v358
    %v361 = vunpack.c.l.s4 1966171168
    %v362 = vunpack.c.0.s8 %v361
    %v363 = vlaneseq
    %v364 = vshrl.u32 %v363, 7
    %v365 = vsub.s32 %v362, %v364
    %v366 = vrot.slane %v338, %v365
    %v367 = vcombine.low %v345, %v352
    %v368 = vcombine.low %v359, %v366
    %v370 = vunpack.c.l.s4 1966171168
    %v371 = vunpack.c.0.s8 %v370
    %v372 = vlaneseq
    %v373 = vshrl.u32 %v372, 7
    %v374 = vsub.s32 %v371, %v373
    %v375 = vrot.slane %v367, %v374
    %v377 = vunpack.c.l.s4 1966171168
    %v378 = vunpack.c.0.s8 %v377
    %v379 = vlaneseq
    %v380 = vshrl.u32 %v379, 7
    %v381 = vsub.s32 %v378, %v380
    %v382 = vrot.slane %v368, %v381
    %v383 = vcombine.low %v375, %v382
    %v386 = vunpack.c.l.b16 %v308
    %v387 = vunpack.c.h.b16 %v308
    %v388 = vunpack.c.l.b16 %v309
    %v389 = vunpack.c.h.b16 %v309
    %v390 = vpack.c.b16 %v388, %v386
    %v391 = vpack.c.b16 %v389, %v387
    %v394 = vcombine.low %v326, %v326
    %v396 = vunpack.c.l.s4 1983009808
    %v397 = vunpack.c.0.s8 %v396
    %v398 = vlaneseq
    %v399 = vshrl.u32 %v398, 7
    %v400 = vsub.s32 %v397, %v399
    %v401 = vrot.slane %v394, %v400
    %v402 = vcombine.low %v401, %v401
    %v403 = vcombine.high %v401, %v401
    %vm406 = vcmask 130048
    %v408 = vsel %vm406, %v383, 0
    %410 = vmatprep.subr.bf16.mxu0 %v391
    %411 = vmatpush1.bf16.msra.mxu0 %v390
    %412 = vmatprep.subr.bf16.mxu0 0
    %413 = vmatpush1.bf16.msra.mxu0 0
    %414 = vmatprep.subr.bf16.mxu0 0
    %415 = vmatpush1.bf16.msra.mxu0 0
    %416 = vmatprep.subr.bf16.mxu0 0
    %417 = vmatpush1.bf16.msra.mxu0 0
    %418 = vmatprep.subr.bf16.mxu0 0
    %419 = vmatpush1.bf16.msra.mxu0 0
    %420 = vmatprep.subr.bf16.mxu0 0
    %421 = vmatpush1.bf16.msra.mxu0 0
    %422 = vmatprep.subr.bf16.mxu0 0
    %423 = vmatpush1.bf16.msra.mxu0 0
    %424 = vmatprep.subr.bf16.mxu0 0
    %425 = vmatpush1.bf16.msra.mxu0 0
    %426 = vmatprep.subr.bf16.mxu0 0
    %427 = vmatpush1.bf16.msra.mxu0 0
    %428 = vmatprep.subr.bf16.mxu0 0
    %429 = vmatpush1.bf16.msra.mxu0 0
    %430 = vmatprep.subr.bf16.mxu0 0
    %431 = vmatpush1.bf16.msra.mxu0 0
    %432 = vmatprep.subr.bf16.mxu0 0
    %433 = vmatpush1.bf16.msra.mxu0 0
    %434 = vmatprep.subr.bf16.mxu0 0
    %435 = vmatpush1.bf16.msra.mxu0 0
    %436 = vmatprep.subr.bf16.mxu0 0
    %437 = vmatpush1.bf16.msra.mxu0 0
    %438 = vmatprep.subr.bf16.mxu0 0
    %439 = vmatpush1.bf16.msra.mxu0 0
    %440 = vmatprep.subr.bf16.mxu0 0
    %441 = vmatpush1.bf16.msra.mxu0 0
    %442 = vmatprep.mubr.bf16.mxu0 0
    %443 = vmatmul.mubr.bf16.gmra.mrb[0].mxu0 %v408
    %v444 = vpop.f32.mrb[0].mxu0
    %v445 = vadd.f32 %v402, %v444
    %v446 = vpop.f32.mrb[0].mxu0
    %v447 = vadd.f32 %v403, %v446
    %v448 = vpop.f32.mrb[0].mxu0
    %v449 = vadd.f32 %v402, %v448
    %v450 = vpop.f32.mrb[0].mxu0
    %v451 = vadd.f32 %v403, %v450
    %452 = vdwg.mxu0
    %v457 = vcombine.low %v445, %v447
    %v458 = vcombine.high %v445, %v447
    %v460 = vunpack.c.l.s4 1983009808
    %v461 = vunpack.c.0.s8 %v460
    %v462 = vlaneseq
    %v463 = vshrl.u32 %v462, 7
    %v464 = vsub.s32 %v461, %v463
    %v465 = vrot.slane %v457, %v464
    %v467 = vunpack.c.l.s4 1983009808
    %v468 = vunpack.c.0.s8 %v467
    %v469 = vlaneseq
    %v470 = vshrl.u32 %v469, 7
    %v471 = vsub.s32 %v468, %v470
    %v472 = vrot.slane %v458, %v471
    %v473 = vcombine.high %v465, %v465
    %v474 = vcombine.high %v472, %v472
    %v475 = vcombine.low %v449, %v451
    %v476 = vcombine.high %v449, %v451
    %v478 = vunpack.c.l.s4 1983009808
    %v479 = vunpack.c.0.s8 %v478
    %v480 = vlaneseq
    %v481 = vshrl.u32 %v480, 7
    %v482 = vsub.s32 %v479, %v481
    %v483 = vrot.slane %v475, %v482
    %v485 = vunpack.c.l.s4 1983009808
    %v486 = vunpack.c.0.s8 %v485
    %v487 = vlaneseq
    %v488 = vshrl.u32 %v487, 7
    %v489 = vsub.s32 %v486, %v488
    %v490 = vrot.slane %v476, %v489
    %v491 = vcombine.high %v483, %v483
    %v492 = vcombine.high %v490, %v490
    %vm501 = vcmask 1041408
    %vm502 = vcmask 519170
    %vm503 = vmor %vm502, %vm501
    %504 = vst.msk [vmem:[#allocation2] sm:$0xf] %vm503, %v465
    %505 = vst.msk [vmem:[#allocation2 + $0x4] sm:$0xf] %vm503, %v473
    %506 = vst.msk [vmem:[#allocation2 + $0x8] sm:$0xf] %vm503, %v472
    %507 = vst.msk [vmem:[#allocation2 + $0xc] sm:$0xf] %vm503, %v474
    %508 = vst.msk [vmem:[#allocation2 + $0x10] sm:$0xf] %vm503, %v483
    %509 = vst.msk [vmem:[#allocation2 + $0x14] sm:$0xf] %vm503, %v491
    %510 = vst.msk [vmem:[#allocation2 + $0x18] sm:$0xf] %vm503, %v490
    %511 = vst.msk [vmem:[#allocation2 + $0x1c] sm:$0xf] %vm503, %v492
    %v512 = vld [vmem:[#allocation11] sm:$0xff]
    %v513 = vld [vmem:[#allocation11 + $0x8] sm:$0xff]
    %v514 = vld [vmem:[#allocation11 + $0x10] sm:$0xff]
    %v515 = vld [vmem:[#allocation11 + $0x18] sm:$0xff]
    %v516 = vld [vmem:[#allocation11 + $0x20] sm:$0xff]
    %v517 = vld [vmem:[#allocation11 + $0x28] sm:$0xff]
    %v518 = vld [vmem:[#allocation11 + $0x30] sm:$0xff]
    %v519 = vld [vmem:[#allocation11 + $0x38] sm:$0xff]
    %v520 = vld [vmem:[#allocation11 + $0x40] sm:$0xff]
    %v521 = vld [vmem:[#allocation11 + $0x48] sm:$0xff]
    %v522 = vld [vmem:[#allocation11 + $0x50] sm:$0xff]
    %v523 = vld [vmem:[#allocation11 + $0x58] sm:$0xff]
    %v524 = vld [vmem:[#allocation11 + $0x60] sm:$0xff]
    %v525 = vld [vmem:[#allocation11 + $0x68] sm:$0xff]
    %v526 = vld [vmem:[#allocation11 + $0x70] sm:$0xff]
    %v527 = vld [vmem:[#allocation11 + $0x78] sm:$0xff]
    %v528 = vld [vmem:[#allocation14] sm:$0x1]
    loop: start=0, step=1, limit=8
    $region58: #{tpu_custom_call.1} parent=1 // loop_pre_header
      _
    $region59: #{tpu_custom_call.1} parent=1 // loop_header
      %s530 = sphi 0, %s534
      %p531 = scmp.ge.s32.totalorder %s530, 8
      %v535 = vphi 0.0, %v686
      %v536 = vphi 0.0, %v736
    $region60: #{tpu_custom_call.1} parent=1 // loop_header_branch
      %533 = sbr.rel (%p531) target = $region64
    $region61: #{tpu_custom_call.1} parent=1 // loop_body
      %s537 = ssub.s32 7, %s530
      %s538 = smul.u32 %s530, 2
      %s539 = smul.addr %s538, 2
      %s540 = scalar_lea.vmem [#allocation2], %s539
      %v541 = vld [vmem:[%s540] sm:$0xf]
      %s542 = smul.u32 %s537, 2
      %s543 = smul.addr %s542, 2
      %s544 = scalar_lea.vmem [#allocation2], %s543
      %v545 = vld [vmem:[%s544] sm:$0xf]
      %v548 = vunpack.c.l.s4 1983009808
      %v549 = vunpack.c.0.s8 %v548
      %v550 = vlaneseq
      %v551 = vshrl.u32 %v550, 7
      %v552 = vsub.s32 %v549, %v551
      %v553 = vrot.slane %v535, %v552
      %554 = vrot.lane.b32.xlu0 %v553, 96
      %v555 = vpop.permute.xlu0 %554
      %v559 = vunpack.c.l.s4 1983009808
      %v560 = vunpack.c.0.s8 %v559
      %v561 = vlaneseq
      %v562 = vshrl.u32 %v561, 7
      %v563 = vsub.s32 %v560, %v562
      %v564 = vrot.slane %v536, %v563
      %565 = vrot.lane.b32.xlu0 %v564, 32
      %v566 = vpop.permute.xlu0 %565
      %vm568 = vcmask 261120
      %v569 = vsel %vm568, %v555, %v566
      %vm570 = vcmask 523264
      %v572 = vsel %vm570, %v569, 0
      %574 = vmatprep.subr.mxu0 %v513
      %575 = vmatpush1.msra.mxu0 %v512
      %576 = vmatprep.subr.mxu0 %v515
      %577 = vmatpush1.msra.mxu0 %v514
      %578 = vmatprep.subr.mxu0 %v517
      %579 = vmatpush1.msra.mxu0 %v516
      %580 = vmatprep.subr.mxu0 %v519
      %581 = vmatpush1.msra.mxu0 %v518
      %582 = vmatprep.subr.mxu0 %v521
      %583 = vmatpush1.msra.mxu0 %v520
      %584 = vmatprep.subr.mxu0 %v523
      %585 = vmatpush1.msra.mxu0 %v522
      %586 = vmatprep.subr.mxu0 %v525
      %587 = vmatpush1.msra.mxu0 %v524
      %588 = vmatprep.subr.mxu0 %v527
      %589 = vmatpush1.msra.mxu0 %v526
      %590 = vmatprep.subr.mxu0 0.0
      %591 = vmatpush1.msra.mxu0 0.0
      %592 = vmatprep.subr.mxu0 0.0
      %593 = vmatpush1.msra.mxu0 0.0
      %594 = vmatprep.subr.mxu0 0.0
      %595 = vmatpush1.msra.mxu0 0.0
      %596 = vmatprep.subr.mxu0 0.0
      %597 = vmatpush1.msra.mxu0 0.0
      %598 = vmatprep.subr.mxu0 0.0
      %599 = vmatpush1.msra.mxu0 0.0
      %600 = vmatprep.subr.mxu0 0.0
      %601 = vmatpush1.msra.mxu0 0.0
      %602 = vmatprep.subr.mxu0 0.0
      %603 = vmatpush1.msra.mxu0 0.0
      %604 = vmatprep.subr.mxu0 0.0
      %605 = vmatpush1.msra.mxu0 0.0
      %606 = vmatprep.subr.mxu0 0.0
      %607 = vmatpush1.msra.mxu0 0.0
      %608 = vmatprep.subr.mxu0 0.0
      %609 = vmatpush1.msra.mxu0 0.0
      %610 = vmatprep.subr.mxu0 0.0
      %611 = vmatpush1.msra.mxu0 0.0
      %612 = vmatprep.subr.mxu0 0.0
      %613 = vmatpush1.msra.mxu0 0.0
      %614 = vmatprep.subr.mxu0 0.0
      %615 = vmatpush1.msra.mxu0 0.0
      %616 = vmatprep.subr.mxu0 0.0
      %617 = vmatpush1.msra.mxu0 0.0
      %618 = vmatprep.subr.mxu0 0.0
      %619 = vmatpush1.msra.mxu0 0.0
      %620 = vmatprep.subr.mxu0 0.0
      %621 = vmatpush1.msra.mxu0 0.0
      %622 = vmatprep.subr.mxu0 0.0
      %623 = vmatpush1.msra.mxu0 0.0
      %624 = vmatprep.subr.mxu0 0.0
      %625 = vmatpush1.msra.mxu0 0.0
      %626 = vmatprep.subr.mxu0 0.0
      %627 = vmatpush1.msra.mxu0 0.0
      %628 = vmatprep.subr.mxu0 0.0
      %629 = vmatpush1.msra.mxu0 0.0
      %630 = vmatprep.subr.mxu0 0.0
      %631 = vmatpush1.msra.mxu0 0.0
      %632 = vmatprep.subr.mxu0 0.0
      %633 = vmatpush1.msra.mxu0 0.0
      %634 = vmatprep.subr.mxu0 0.0
      %635 = vmatpush1.msra.mxu0 0.0
      %636 = vmatprep.subr.mxu0 0.0
      %637 = vmatpush1.msra.mxu0 0.0
      %638 = vmatprep.mubr.f32.mxu0 0.0
      %639 = vmatmul.mubr.f32.gmra.mrb[0].mxu0 %v572
      %v640 = vpop.f32.mrb[0].mxu0
      %v641 = vadd.f32 0.0, %v640
      %v642 = vpop.f32.mrb[0].mxu0
      %v643 = vadd.f32 0.0, %v642
      %644 = vdwg.mxu0
      %v645 = vadd.f32 %v541, %v641
      %v646 = vxor.u32 %v645, 2147483648
      %v647 = vmul.f32 %v646, 1.442695
      %v648 = vpow.pop %v647
      %v649 = vadd.f32 %v648, 1.0
      %v650 = vrcp.pop %v649
      %v651 = vmul.f32 1.0, %v650
      %v653 = vlaneseq
      %v654 = vshrl.u32 %v653, 7
      %v655 = vsub.s32 0, %v654
      %v656 = vrot.slane %v528, %v655
      %657 = vrot.lane.b32.xlu0 %v656, 64
      %v658 = vpop.permute.xlu0 %657
      %v660 = vadd.f32 %v641, %v658
      %v663 = vunpack.c.l.s4 1983009808
      %v664 = vunpack.c.0.s8 %v663
      %v665 = vlaneseq
      %v666 = vshrl.u32 %v665, 7
      %v667 = vsub.s32 %v664, %v666
      %v668 = vrot.slane %v660, %v667
      %669 = vrot.lane.b32.xlu0 %v668, 64
      %v670 = vpop.permute.xlu0 %669
      %v672 = vmul.f32 %v651, %v670
      %674 = vrot.lane.b32.xlu0 %v672, 64
      %v675 = vpop.permute.xlu0 %674
      %v677 = vadd.f32 %v541, %v675
      %v678 = vtanh.pop %v677
      %v679 = vsub.f32 1.0, %v651
      %681 = vrot.lane.b32.xlu0 %v678, 96
      %v682 = vpop.permute.xlu0 %681
      %v684 = vmul.f32 %v679, %v682
      %v685 = vmul.f32 %v651, %v535
      %v686 = vadd.f32 %v684, %v685
      %v689 = vcombine.low %v641, %v643
      %v691 = vunpack.c.l.s4 1983009808
      %v692 = vunpack.c.0.s8 %v691
      %v693 = vlaneseq
      %v694 = vshrl.u32 %v693, 7
      %v695 = vsub.s32 %v692, %v694
      %v696 = vrot.slane %v689, %v695
      %v698 = vadd.f32 %v545, %v696
      %v699 = vxor.u32 %v698, 2147483648
      %v700 = vmul.f32 %v699, 1.442695
      %v701 = vpow.pop %v700
      %v702 = vadd.f32 %v701, 1.0
      %v703 = vrcp.pop %v702
      %v704 = vmul.f32 1.0, %v703
      %v706 = vadd.f32 %v643, %v656
      %v709 = vunpack.c.l.s4 1983009808
      %v710 = vunpack.c.0.s8 %v709
      %v711 = vlaneseq
      %v712 = vshrl.u32 %v711, 7
      %v713 = vsub.s32 %v710, %v712
      %v714 = vrot.slane %v706, %v713
      %715 = vrot.lane.b32.xlu0 %v714, 64
      %v716 = vpop.permute.xlu0 %715
      %v718 = vmul.f32 %v704, %v716
      %720 = vrot.lane.b32.xlu0 %v545, 96
      %v721 = vpop.permute.xlu0 %720
      %v722 = vrot.slane %v721, 2
      %725 = vrot.lane.b32.xlu0 %v718, 32
      %v726 = vpop.permute.xlu0 %725
      %v728 = vadd.f32 %v722, %v726
      %v729 = vtanh.pop %v728
      %v731 = vrot.slane %v704, 2
      %v733 = vsub.f32 1.0, %v731
      %v734 = vmul.f32 %v733, %v729
      %v735 = vmul.f32 %v731, %v536
      %v736 = vadd.f32 %v734, %v735
      %v739 = vunpack.c.l.s4 1983009808
      %v740 = vunpack.c.0.s8 %v739
      %v741 = vlaneseq
      %v742 = vshrl.u32 %v741, 7
      %v743 = vsub.s32 %v740, %v742
      %v744 = vrot.slane %v686, %v743
      %745 = vrot.lane.b32.xlu0 %v744, 96
      %v746 = vpop.permute.xlu0 %745
      %s748 = scalar_lea.vmem [#allocation15], %s538
      %vm749 = vcmask 254976
      %750 = vst.msk [vmem:[%s748] sm:$0x3] %vm749, %v746
      %v753 = vunpack.c.l.s4 1983009808
      %v754 = vunpack.c.0.s8 %v753
      %v755 = vlaneseq
      %v756 = vshrl.u32 %v755, 7
      %v757 = vsub.s32 %v754, %v756
      %v758 = vrot.slane %v736, %v757
      %759 = vrot.lane.b32.xlu0 %v758, 32
      %v760 = vpop.permute.xlu0 %759
      %s762 = scalar_lea.vmem [#allocation15], %s542
      %vm763 = vcmask 517376
      %764 = vst.msk [vmem:[%s762] sm:$0x3] %vm763, %v760
    $region62: #{tpu_custom_call.1} parent=1 // loop_footer
      %s534 = sadd.s32 1, %s530
    $region63: #{tpu_custom_call.1} parent=1 // loop_footer_branch
      %529 = sbr.rel target = $region59
    $region64: #{tpu_custom_call.1} parent=1 // loop_exit
      _
    // Predicated region
    $region65: #{tpu_custom_call.1} parent=1 // pred_check
      _
    $region66: #{tpu_custom_call.1} parent=1 // pred_check_branch
      %766 = sbr.rel (0) target = $region68
    $region67: #{tpu_custom_call.1} parent=1 // pred_region
      %s768 = ssub.s32 256, 256
      %769 = vsyncadd [#allocation5], %s768
      %s770 = sshll.u32 [#allocation15], 4
      %s771 = int_to_ptr.vmem [resolvable:$true] %s770
      %776 = dma.vmem_to_hbm [thread:$0]  %s771, 256, %s7, [#allocation5], 32, 32, 2
    $region68: #{tpu_custom_call.1} parent=1 // pred_fallthru
      _
    // Predicated region
    $region69: #{tpu_custom_call.1} parent=1 // pred_check
      _
    $region70: #{tpu_custom_call.1} parent=1 // pred_check_branch
      %778 = sbr.rel (0) target = $region72
    $region71: #{tpu_custom_call.1} parent=1 // pred_region
      %779 = dma.done [#allocation5], 256
    $region72: #{tpu_custom_call.1} parent=1 // pred_fallthru
      _
    %780 = vsyncpa [#allocation4], 1
    %781 = vsyncpa [#allocation7], 1
    %782 = vsyncpa [#allocation10], 1
    %783 = vsyncpa [#allocation13], 1
    %784 = vsyncpa [#allocation5], 1

</llo_original>
